<compile_context>
chip_gen: v7x
topology: tpu7x:2x2x1
jax: 0.10.0
libtpu: 0.0.40
codegen_flags: <defaults>
</compile_context>

<pallas_src>
import functools

import jax
import jax.numpy as jnp
from jax.experimental import pallas as pl
from jax.experimental.pallas import tpu as pltpu


def _round_up(n, m):
    return (n + m - 1) // m * m


def _sigmoid(x):
    # sigmoid(x) = 0.5 * (1 + tanh(x/2)): single EUP op instead of exp + divide.
    return 0.5 * (jnp.tanh(0.5 * x) + 1.0)


def _pad_gate_blocks(w, c, c_pad):
    """Pad a (4*c, ...) gate-stacked tensor (i|f|g|o blocks) to (4*c_pad, ...)
    with zeros so every gate slice starts on a lane-tile boundary."""
    if c_pad == c:
        return w
    blocks = [w[k * c:(k + 1) * c] for k in range(4)]
    pad = ((0, c_pad - c),) + tuple((0, 0) for _ in range(w.ndim - 1))
    return jnp.concatenate([jnp.pad(b, pad) for b in blocks], axis=0)


# ---------------------------------------------------------------------------
# Kernel 1: input linearity for all (b, t) rows as one tiled GEMM (+ bias).
# ---------------------------------------------------------------------------
def input_projection_kernel(x_ref, wi_ref, b_ref, out_ref):
    # x_ref: (mt, D), wi_ref: (D, nt), b_ref: (1, nt), out_ref: (mt, nt)
    out_ref[...] = (jnp.dot(x_ref[...], wi_ref[...],
                            preferred_element_type=jnp.float32)
                    + b_ref[...])


# ---------------------------------------------------------------------------
# Kernel 2: sequential recurrence, time chunked inside the kernel.
# ---------------------------------------------------------------------------
def lstm_recurrence_kernel(len_smem, px_ref, ws_ref, wp_ref, lenv_ref,
                           h0_ref, c0_ref,
                           out_ref, hT_ref, cT_ref,
                           h_scr, c_scr, *,
                           t_chunk, cell, b_tile, memory_clip, state_clip,
                           mxu_dtype):
    bi = pl.program_id(0)            # batch tile   ("parallel")
    ti = pl.program_id(1)            # time chunk   ("arbitrary", sequential)
    chunk_start = ti * t_chunk

    @pl.when(ti == 0)
    def _():
        h_scr[...] = h0_ref[...]
        c_scr[...] = c0_ref[...]

    # batch_lengths are descending (PyTorch module contract), so the first row
    # of this batch tile carries the tile's max length.
    max_len = len_smem[bi * b_tile]

    @pl.when(chunk_start >= max_len)
    def _():
        # Every timestep of this chunk is padding for every row in the tile:
        # emit zeros, carry state untouched, skip both matmuls.
        out_ref[...] = jnp.zeros_like(out_ref)

    @pl.when(chunk_start < max_len)
    def _():
        lengths = lenv_ref[...]                       # (b_tile, 1) int32
        ws = ws_ref[...]                              # resident (H, 4C) bf16
        wp = wp_ref[...]                              # resident (C, H)  bf16
        for s in range(t_chunk):                      # static unroll
            t = chunk_start + s
            h_prev = h_scr[...]                       # (b_tile, H) f32
            c_prev = c_scr[...]                       # (b_tile, C) f32

            proj = (px_ref[:, s, :]                   # precomputed x@Wi^T + b
                    + jnp.dot(h_prev.astype(mxu_dtype), ws,
                              preferred_element_type=jnp.float32))

            input_gate = _sigmoid(proj[:, 0 * cell:1 * cell])
            forget_gate = _sigmoid(proj[:, 1 * cell:2 * cell])
            memory_init = jnp.tanh(proj[:, 2 * cell:3 * cell])
            output_gate = _sigmoid(proj[:, 3 * cell:4 * cell])

            memory = input_gate * memory_init + forget_gate * c_prev
            # NOTE: Python truthiness on purpose — a clip value of 0.0 disables
            # clipping, matching the AllenNLP/PyTorch behavior.
            if memory_clip:
                memory = jnp.clip(memory, -memory_clip, memory_clip)

            pre = output_gate * jnp.tanh(memory)
            h_new = jnp.dot(pre.astype(mxu_dtype), wp,
                            preferred_element_type=jnp.float32)
            if state_clip:
                h_new = jnp.clip(h_new, -state_clip, state_clip)

            # Rows whose sequence has ended keep previous state, emit zeros.
            active = lengths > t                      # (b_tile, 1) bool
            c_scr[...] = jnp.where(active, memory, c_prev)
            h_scr[...] = jnp.where(active, h_new, h_prev)
            out_ref[:, s, :] = jnp.where(active, h_new, 0.0)

    @pl.when(ti == pl.num_programs(1) - 1)
    def _():
        hT_ref[...] = h_scr[...]
        cT_ref[...] = c_scr[...]


# ---------------------------------------------------------------------------
# Wrapper matching the PyTorch module forward (weights in PyTorch layout).
# ---------------------------------------------------------------------------
def lstm_cell_with_projection(inputs, batch_lengths,
                              w_input, w_state, b_state, w_proj,
                              memory_cell_clip_value=None,
                              state_projection_clip_value=None,
                              initial_state=None, *,
                              mxu_dtype=jnp.bfloat16,
                              t_chunk=16, m_tile=512, n_tile=512,
                              vmem_limit_bytes=64 * 1024 * 1024):
    """inputs: (B, T, D_in) f32; batch_lengths: (B,) int32 (descending);
    w_input: (4C, D_in); w_state: (4C, H); b_state: (4C,); w_proj: (H, C)."""
    B, T, D_in = inputs.shape
    four_c = w_input.shape[0]
    C = four_c // 4
    H = w_proj.shape[0]

    # ---- lane/sublane padding (zero padding preserves the math exactly) ----
    B_pad = _round_up(B, 8)
    D_pad = _round_up(D_in, 128)
    C_pad = _round_up(C, 128)
    H_pad = _round_up(H, 128)
    four_c_pad = 4 * C_pad

    t_chunk = max(8, (t_chunk // 8) * 8)
    t_chunk = min(t_chunk, _round_up(T, 8))
    T_pad = _round_up(T, t_chunk)
    n_tchunks = T_pad // t_chunk

    # >= 2 batch tiles when possible so v7x can shard the recurrence per core.
    b_tile = B_pad // 2 if B_pad % 16 == 0 else B_pad
    n_btiles = B_pad // b_tile

    # ---- operand preparation ----
    x_pad = jnp.pad(jnp.asarray(inputs, jnp.float32),
                    ((0, B_pad - B), (0, T_pad - T), (0, D_pad - D_in)))
    M = B_pad * T_pad
    x2d = x_pad.reshape(M, D_pad).astype(mxu_dtype)       # (B*T, D) flat rows

    wi = _pad_gate_blocks(jnp.asarray(w_input, jnp.float32), C, C_pad)
    wi = jnp.pad(wi, ((0, 0), (0, D_pad - D_in)))
    wi_t = wi.T.astype(mxu_dtype)                          # (D_pad, 4C_pad)

    ws = _pad_gate_blocks(jnp.asarray(w_state, jnp.float32), C, C_pad)
    ws = jnp.pad(ws, ((0, 0), (0, H_pad - H)))
    ws_t = ws.T.astype(mxu_dtype)                          # (H_pad, 4C_pad)

    b2d = _pad_gate_blocks(jnp.asarray(b_state, jnp.float32),
                           C, C_pad).reshape(1, four_c_pad)

    wp = jnp.pad(jnp.asarray(w_proj, jnp.float32),
                 ((0, H_pad - H), (0, C_pad - C)))
    wp_t = wp.T.astype(mxu_dtype)                          # (C_pad, H_pad)

    lengths = jnp.pad(jnp.asarray(batch_lengths, jnp.int32), (0, B_pad - B))
    lengths_2d = lengths.reshape(B_pad, 1)

    if initial_state is None:
        h0 = jnp.zeros((B_pad, H_pad), jnp.float32)
        c0 = jnp.zeros((B_pad, C_pad), jnp.float32)
    else:
        h0 = jnp.pad(jnp.asarray(initial_state[0], jnp.float32).reshape(B, H),
                     ((0, B_pad - B), (0, H_pad - H)))
        c0 = jnp.pad(jnp.asarray(initial_state[1], jnp.float32).reshape(B, C),
                     ((0, B_pad - B), (0, C_pad - C)))

    # ---- Kernel 1: big input GEMM (+ bias), tiled over (M, 4C) -------------
    mt = max(8, min(m_tile, M) // 8 * 8)
    while M % mt:
        mt -= 8
    nt = min(n_tile, four_c_pad)
    while four_c_pad % nt:
        nt -= 128

    px2d = pl.pallas_call(
        input_projection_kernel,
        out_shape=jax.ShapeDtypeStruct((M, four_c_pad), jnp.float32),
        grid_spec=pltpu.PrefetchScalarGridSpec(
            num_scalar_prefetch=0,
            grid=(M // mt, four_c_pad // nt),
            in_specs=[
                pl.BlockSpec((mt, D_pad), lambda i, j: (i, 0)),
                pl.BlockSpec((D_pad, nt), lambda i, j: (0, j)),
                pl.BlockSpec((1, nt), lambda i, j: (0, j)),
            ],
            out_specs=pl.BlockSpec((mt, nt), lambda i, j: (i, j)),
        ),
        compiler_params=pltpu.CompilerParams(
            dimension_semantics=("parallel", "parallel"),
            vmem_limit_bytes=vmem_limit_bytes),
    )(x2d, wi_t, b2d)
    px = px2d.reshape(B_pad, T_pad, four_c_pad)            # layout-free reshape

    # ---- Kernel 2: chunked sequential recurrence ----------------------------
    kernel = functools.partial(
        lstm_recurrence_kernel,
        t_chunk=t_chunk, cell=C_pad, b_tile=b_tile,
        memory_clip=memory_cell_clip_value,
        state_clip=state_projection_clip_value,
        mxu_dtype=mxu_dtype)

    out_pad, h_final, c_final = pl.pallas_call(
        kernel,
        out_shape=(
            jax.ShapeDtypeStruct((B_pad, T_pad, H_pad), jnp.float32),
            jax.ShapeDtypeStruct((B_pad, H_pad), jnp.float32),
            jax.ShapeDtypeStruct((B_pad, C_pad), jnp.float32),
        ),
        grid_spec=pltpu.PrefetchScalarGridSpec(
            num_scalar_prefetch=1,                          # lengths -> SMEM
            grid=(n_btiles, n_tchunks),
            in_specs=[
                pl.BlockSpec((b_tile, t_chunk, four_c_pad),
                             lambda bi, ti, lens: (bi, ti, 0)),   # streamed px
                pl.BlockSpec((H_pad, four_c_pad),
                             lambda bi, ti, lens: (0, 0)),        # resident Ws
                pl.BlockSpec((C_pad, H_pad),
                             lambda bi, ti, lens: (0, 0)),        # resident Wp
                pl.BlockSpec((b_tile, 1),
                             lambda bi, ti, lens: (bi, 0)),       # lengths mask
                pl.BlockSpec((b_tile, H_pad),
                             lambda bi, ti, lens: (bi, 0)),       # h0
                pl.BlockSpec((b_tile, C_pad),
                             lambda bi, ti, lens: (bi, 0)),       # c0
            ],
            out_specs=(
                pl.BlockSpec((b_tile, t_chunk, H_pad),
                             lambda bi, ti, lens: (bi, ti, 0)),   # outputs
                pl.BlockSpec((b_tile, H_pad),
                             lambda bi, ti, lens: (bi, 0)),       # final h
                pl.BlockSpec((b_tile, C_pad),
                             lambda bi, ti, lens: (bi, 0)),       # final c
            ),
            scratch_shapes=[
                pltpu.VMEM((b_tile, H_pad), jnp.float32),         # carried h
                pltpu.VMEM((b_tile, C_pad), jnp.float32),         # carried c
            ]),
        compiler_params=pltpu.CompilerParams(
            dimension_semantics=("parallel", "arbitrary"),
            vmem_limit_bytes=vmem_limit_bytes),
    )(lengths, px, ws_t, wp_t, lengths_2d, h0, c0)

    outputs = out_pad[:B, :T, :H]
    final_state = (h_final[:B, :H][None], c_final[:B, :C][None])
    return outputs, final_state


# ---------------------------------------------------------------------------
# Pure-JAX reference (same math as the PyTorch forward, eval mode).
# ---------------------------------------------------------------------------
def reference_lstm(inputs, batch_lengths, w_input, w_state, b_state, w_proj,
                   memory_cell_clip_value=None, state_projection_clip_value=None):
    B, T, _ = inputs.shape
    C = w_input.shape[0] // 4
    H = w_proj.shape[0]
    hp = jax.lax.Precision.HIGHEST
    h = jnp.zeros((B, H), jnp.float32)
    c = jnp.zeros((B, C), jnp.float32)
    outs = []
    for t in range(T):
        x_t = inputs[:, t]
        proj = (jnp.dot(x_t, w_input.T, precision=hp)
                + jnp.dot(h, w_state.T, precision=hp) + b_state)
        i_g = jax.nn.sigmoid(proj[:, 0 * C:1 * C])
        f_g = jax.nn.sigmoid(proj[:, 1 * C:2 * C])
        g = jnp.tanh(proj[:, 2 * C:3 * C])
        o_g = jax.nn.sigmoid(proj[:, 3 * C:4 * C])
        mem = i_g * g + f_g * c
        if memory_cell_clip_value:
            mem = jnp.clip(mem, -memory_cell_clip_value, memory_cell_clip_value)
        h_new = jnp.dot(o_g * jnp.tanh(mem), w_proj.T, precision=hp)
        if state_projection_clip_value:
            h_new = jnp.clip(h_new, -state_projection_clip_value,
                             state_projection_clip_value)
        active = (batch_lengths > t)[:, None]
        c = jnp.where(active, mem, c)
        h = jnp.where(active, h_new, h)
        outs.append(jnp.where(active, h_new, 0.0))
    return jnp.stack(outs, axis=1), (h[None], c[None])


if __name__ == "__main__":
    key = jax.random.PRNGKey(0)
    B, T, D_in, C, H = 2, 8, 32, 32, 16   # batch, seq, input, cell, hidden

    k1, k2, k3, k4, k5 = jax.random.split(key, 5)
    inputs = jax.random.normal(k1, (B, T, D_in), dtype=jnp.float32)
    w_input = jax.random.normal(k2, (4 * C, D_in), dtype=jnp.float32) * 0.2
    w_state = jax.random.normal(k3, (4 * C, H), dtype=jnp.float32) * 0.2
    b_state = jax.random.normal(k4, (4 * C,), dtype=jnp.float32) * 0.1
    w_proj = jax.random.normal(k5, (H, C), dtype=jnp.float32) * 0.2
    batch_lengths = jnp.array([8, 5], dtype=jnp.int32)   # descending, like torch

    mc, sc = 3.0, 3.0   # memory_cell_clip_value, state_projection_clip_value

    ref_out, (ref_h, ref_c) = reference_lstm(
        inputs, batch_lengths, w_input, w_state, b_state, w_proj,
        memory_cell_clip_value=mc, state_projection_clip_value=sc)

    # 1) f32 MXU operands: validates the kernel math tightly (MXU does
    #    multi-pass bf16 for f32, so near-f32 accuracy).
    out32, (h32, c32) = lstm_cell_with_projection(
        inputs, batch_lengths, w_input, w_state, b_state, w_proj,
        memory_cell_clip_value=mc, state_projection_clip_value=sc,
        mxu_dtype=jnp.float32)
    out32 = jax.block_until_ready(out32)
    tight = dict(rtol=5e-3, atol=5e-3)
    assert out32.shape == (B, T, H)
    assert h32.shape == (1, B, H) and c32.shape == (1, B, C)
    assert jnp.allclose(out32, ref_out, **tight), \
        float(jnp.max(jnp.abs(out32 - ref_out)))
    assert jnp.allclose(h32, ref_h, **tight)
    assert jnp.allclose(c32, ref_c, **tight)

    # 2) Performance configuration: bf16 MXU operands (default). bf16 operand
    #    rounding compounds over the T recurrent steps, so the tolerance is
    #    looser here; state/gate math stays f32.
    outputs, (h_f, c_f) = lstm_cell_with_projection(
        inputs, batch_lengths, w_input, w_state, b_state, w_proj,
        memory_cell_clip_value=mc, state_projection_clip_value=sc)
    outputs = jax.block_until_ready(outputs)
    loose = dict(rtol=3e-2, atol=3e-2)
    assert outputs.shape == (B, T, H)
    assert h_f.shape == (1, B, H) and c_f.shape == (1, B, C)
    assert jnp.allclose(outputs, ref_out, **loose), \
        float(jnp.max(jnp.abs(outputs - ref_out)))
    assert jnp.allclose(h_f, ref_h, **loose)
    assert jnp.allclose(c_f, ref_c, **loose)

    print("KERNEL_OK")
</pallas_src>

<mosaic_0001>
module attributes {stable_mosaic.version = 11 : i64} {
  func.func @input_projection_kernel(%arg0: i32, %arg1: i32, %arg2: memref<64x128xf32, #tpu.memory_space<vmem>>, %arg3: memref<128x512xf32, #tpu.memory_space<vmem>>, %arg4: memref<1x512xf32, #tpu.memory_space<vmem>>, %arg5: memref<64x512xf32, #tpu.memory_space<vmem>>) attributes {dimension_semantics = [#tpu.dimension_semantics<parallel>, #tpu.dimension_semantics<parallel>], iteration_bounds = array<i64: 1, 1>, scalar_prefetch = 0 : i64, scratch_operands = 0 : i64, tpu.core_type = #tpu.core_type<tc>, window_params = [{transform_indices = @transform_0, window_bounds = array<i64: 64, 128>}, {transform_indices = @transform_1, window_bounds = array<i64: 128, 512>}, {transform_indices = @transform_2, window_bounds = array<i64: 1, 512>}, {transform_indices = @transform_3, window_bounds = array<i64: 64, 512>}]} {
    %c0 = arith.constant 0 : index
    %c0_0 = arith.constant 0 : index
    %0 = vector.load %arg2[%c0, %c0_0] : memref<64x128xf32, #tpu.memory_space<vmem>>, vector<64x128xf32>
    %c0_1 = arith.constant 0 : index
    %c0_2 = arith.constant 0 : index
    %1 = vector.load %arg3[%c0_1, %c0_2] : memref<128x512xf32, #tpu.memory_space<vmem>>, vector<128x512xf32>
    %cst = arith.constant dense<0.000000e+00> : vector<64x512xf32>
    %2 = tpu.matmul %0, %1, %cst {dimension_numbers = #tpu.dot_dimension_numbers<[1], [0], [0], [1], [0, 0, 1, 1], [], []>} : vector<64x128xf32>, vector<128x512xf32>, vector<64x512xf32> -> vector<64x512xf32>
    %c0_3 = arith.constant 0 : index
    %c0_4 = arith.constant 0 : index
    %3 = vector.load %arg4[%c0_3, %c0_4] : memref<1x512xf32, #tpu.memory_space<vmem>>, vector<1x512xf32>
    %4 = vector.broadcast %3 : vector<1x512xf32> to vector<64x512xf32>
    %5 = arith.addf %2, %4 : vector<64x512xf32>
    %c0_5 = arith.constant 0 : index
    %c0_6 = arith.constant 0 : index
    %6 = vector.load %arg5[%c0_5, %c0_6] : memref<64x512xf32, #tpu.memory_space<vmem>>, vector<64x512xf32>
    tpu.vector_store %arg5[%c0_5, %c0_6], %5 {strides = array<i32>} : memref<64x512xf32, #tpu.memory_space<vmem>>, vector<64x512xf32>,
    return
  }
  func.func @transform_0(%arg0: i32, %arg1: i32) -> (i32, i32) {
    %c0_i32 = arith.constant 0 : i32
    %c0_i32_0 = arith.constant 0 : i32
    return %arg0, %c0_i32 : i32, i32
  }
  func.func @transform_1(%arg0: i32, %arg1: i32) -> (i32, i32) {
    %c0_i32 = arith.constant 0 : i32
    %c0_i32_0 = arith.constant 0 : i32
    return %c0_i32, %arg1 : i32, i32
  }
  func.func @transform_2(%arg0: i32, %arg1: i32) -> (i32, i32) {
    %c0_i32 = arith.constant 0 : i32
    %c0_i32_0 = arith.constant 0 : i32
    return %c0_i32, %arg1 : i32, i32
  }
  func.func @transform_3(%arg0: i32, %arg1: i32) -> (i32, i32) {
    %c0_i32 = arith.constant 0 : i32
    return %arg0, %arg1 : i32, i32
  }
}

</mosaic_0001>

<llo_original>
// kernel: tpu_custom_call.1
$region0: #{tpu_custom_call.1}
  #allocation0 [shape = 'u32[]', space=smem, size = 0x4, offset = 0x4, fixed_abs, tag = 'smem constant byte address 0x4 - core index']
  #allocation1 [shape = 'u32[144,128]{1,0:T(1,128)}', space=vmem, size = 0x12000, scoped, tag = 'internal scratch']
  %s0 = inlined_call_operand.hbm [shape: f32[64,128], index: 0, kind: input, shape index: {}]
  %s1 = inlined_call_operand.hbm [shape: f32[128,512], index: 1, kind: input, shape index: {}]
  %s2 = inlined_call_operand.hbm [shape: f32[1,512], index: 2, kind: input, shape index: {}]
  %s3 = inlined_call_operand.hbm [shape: f32[64,512], index: 3, kind: output, shape index: {}]
  %s4 = sld [smem:[#allocation0]]
  $region34: #{tpu_custom_call.1} parent=0
    _
  %s6 = ssub.s32 1, %s4
  %s7 = scalar_select 0, %s6, %s4
  $region1: #{tpu_custom_call.1} parent=0
    #allocation2 [shape = 'u8[32768]{0}', space=vmem, size = 0x8000, scoped, tag = 'input window, operand 0, single buffered']
    #allocation3 [shape = 's32[1]{0}', space=sflag, size = 0x4, scoped, tag = 'scoped memory for tpu_custom_call.1']
    #allocation4 [shape = 's32[1]{0}', space=sflag, size = 0x4, scoped, tag = 'scoped memory for tpu_custom_call.1']
    #allocation5 [shape = 'u8[262144]{0}', space=vmem, size = 0x40000, scoped, tag = 'input window, operand 1, single buffered']
    #allocation6 [shape = 's32[1]{0}', space=sflag, size = 0x4, scoped, tag = 'scoped memory for tpu_custom_call.1']
    #allocation7 [shape = 'u8[2048]{0}', space=vmem, size = 0x800, scoped, tag = 'input window, operand 2, single buffered']
    #allocation8 [shape = 'u8[131072]{0}', space=vmem, size = 0x20000, scoped, tag = 'output window, operand 0, single buffered']
    %8 = vsyncpa [#allocation3], 0
    %9 = vsyncpa [#allocation6], 0
    %10 = vsyncpa [#allocation4], 0
    // Predicated region
    $region2: #{tpu_custom_call.1} parent=1 // pred_check
      _
    $region3: #{tpu_custom_call.1} parent=1 // pred_check_branch
      %12 = sbr.rel (0) target = $region5
    $region4: #{tpu_custom_call.1} parent=1 // pred_region
      %s14 = ssub.s32 1024, 1024
      %15 = vsyncadd [#allocation3], %s14
      %s16 = sshll.u32 [#allocation2], 4
      %s17 = int_to_ptr.vmem [resolvable:$true] %s16
      %22 = dma.hbm_to_vmem [thread:$0]  %s0, 1024, %s17, [#allocation3], 128, 128, 8
    $region5: #{tpu_custom_call.1} parent=1 // pred_fallthru
      _
    // Predicated region
    $region6: #{tpu_custom_call.1} parent=1 // pred_check
      _
    $region7: #{tpu_custom_call.1} parent=1 // pred_check_branch
      %24 = sbr.rel (0) target = $region9
    $region8: #{tpu_custom_call.1} parent=1 // pred_region
      %s26 = ssub.s32 8192, 8192
      %27 = vsyncadd [#allocation6], %s26
      %s28 = sshll.u32 [#allocation5], 4
      %s29 = int_to_ptr.vmem [resolvable:$true] %s28
      %34 = dma.hbm_to_vmem [thread:$0]  %s1, 8192, %s29, [#allocation6], 512, 512, 32
    $region9: #{tpu_custom_call.1} parent=1 // pred_fallthru
      _
    // Predicated region
    $region10: #{tpu_custom_call.1} parent=1 // pred_check
      _
    $region11: #{tpu_custom_call.1} parent=1 // pred_check_branch
      %36 = sbr.rel (0) target = $region13
    $region12: #{tpu_custom_call.1} parent=1 // pred_region
      %s38 = ssub.s32 64, 64
      %39 = vsyncadd [#allocation6], %s38
      %s41 = sshll.u32 [#allocation7], 4
      %s42 = int_to_ptr.vmem [resolvable:$true] %s41
      %44 = dma.hbm_to_vmem [thread:$0]  %s2, 64, %s42, [#allocation6]
    $region13: #{tpu_custom_call.1} parent=1 // pred_fallthru
      _
    // Predicated region
    $region14: #{tpu_custom_call.1} parent=1 // pred_check
      _
    $region15: #{tpu_custom_call.1} parent=1 // pred_check_branch
      %46 = sbr.rel (0) target = $region17
    $region16: #{tpu_custom_call.1} parent=1 // pred_region
      %47 = dma.done [#allocation3], 1024
    $region17: #{tpu_custom_call.1} parent=1 // pred_fallthru
      _
    // Predicated region
    $region18: #{tpu_custom_call.1} parent=1 // pred_check
      _
    $region19: #{tpu_custom_call.1} parent=1 // pred_check_branch
      %49 = sbr.rel (0) target = $region21
    $region20: #{tpu_custom_call.1} parent=1 // pred_region
      %50 = dma.done [#allocation6], 8192
    $region21: #{tpu_custom_call.1} parent=1 // pred_fallthru
      _
    // Predicated region
    $region22: #{tpu_custom_call.1} parent=1 // pred_check
      _
    $region23: #{tpu_custom_call.1} parent=1 // pred_check_branch
      %52 = sbr.rel (0) target = $region25
    $region24: #{tpu_custom_call.1} parent=1 // pred_region
      %53 = dma.done [#allocation6], 64
    $region25: #{tpu_custom_call.1} parent=1 // pred_fallthru
      _
    %v54 = vld [vmem:[#allocation2] sm:$0xff]
    %v55 = vld [vmem:[#allocation2 + $0x8] sm:$0xff]
    %v56 = vld [vmem:[#allocation2 + $0x10] sm:$0xff]
    %v57 = vld [vmem:[#allocation2 + $0x18] sm:$0xff]
    %v58 = vld [vmem:[#allocation2 + $0x20] sm:$0xff]
    %v59 = vld [vmem:[#allocation2 + $0x28] sm:$0xff]
    %v60 = vld [vmem:[#allocation2 + $0x30] sm:$0xff]
    %v61 = vld [vmem:[#allocation2 + $0x38] sm:$0xff]
    %v62 = vld [vmem:[#allocation5] sm:$0xff]
    %v63 = vld [vmem:[#allocation5 + $0x8] sm:$0xff]
    %v64 = vld [vmem:[#allocation5 + $0x10] sm:$0xff]
    %v65 = vld [vmem:[#allocation5 + $0x18] sm:$0xff]
    %v66 = vld [vmem:[#allocation5 + $0x20] sm:$0xff]
    %v67 = vld [vmem:[#allocation5 + $0x28] sm:$0xff]
    %v68 = vld [vmem:[#allocation5 + $0x30] sm:$0xff]
    %v69 = vld [vmem:[#allocation5 + $0x38] sm:$0xff]
    %v70 = vld [vmem:[#allocation5 + $0x40] sm:$0xff]
    %v71 = vld [vmem:[#allocation5 + $0x48] sm:$0xff]
    %v72 = vld [vmem:[#allocation5 + $0x50] sm:$0xff]
    %v73 = vld [vmem:[#allocation5 + $0x58] sm:$0xff]
    %v74 = vld [vmem:[#allocation5 + $0x60] sm:$0xff]
    %v75 = vld [vmem:[#allocation5 + $0x68] sm:$0xff]
    %v76 = vld [vmem:[#allocation5 + $0x70] sm:$0xff]
    %v77 = vld [vmem:[#allocation5 + $0x78] sm:$0xff]
    %v78 = vld [vmem:[#allocation5 + $0x80] sm:$0xff]
    %v79 = vld [vmem:[#allocation5 + $0x88] sm:$0xff]
    %v80 = vld [vmem:[#allocation5 + $0x90] sm:$0xff]
    %v81 = vld [vmem:[#allocation5 + $0x98] sm:$0xff]
    %v82 = vld [vmem:[#allocation5 + $0xa0] sm:$0xff]
    %v83 = vld [vmem:[#allocation5 + $0xa8] sm:$0xff]
    %v84 = vld [vmem:[#allocation5 + $0xb0] sm:$0xff]
    %v85 = vld [vmem:[#allocation5 + $0xb8] sm:$0xff]
    %v86 = vld [vmem:[#allocation5 + $0xc0] sm:$0xff]
    %v87 = vld [vmem:[#allocation5 + $0xc8] sm:$0xff]
    %v88 = vld [vmem:[#allocation5 + $0xd0] sm:$0xff]
    %v89 = vld [vmem:[#allocation5 + $0xd8] sm:$0xff]
    %v90 = vld [vmem:[#allocation5 + $0xe0] sm:$0xff]
    %v91 = vld [vmem:[#allocation5 + $0xe8] sm:$0xff]
    %v92 = vld [vmem:[#allocation5 + $0xf0] sm:$0xff]
    %v93 = vld [vmem:[#allocation5 + $0xf8] sm:$0xff]
    %v94 = vld [vmem:[#allocation5 + $0x100] sm:$0xff]
    %v95 = vld [vmem:[#allocation5 + $0x108] sm:$0xff]
    %v96 = vld [vmem:[#allocation5 + $0x110] sm:$0xff]
    %v97 = vld [vmem:[#allocation5 + $0x118] sm:$0xff]
    %v98 = vld [vmem:[#allocation5 + $0x120] sm:$0xff]
    %v99 = vld [vmem:[#allocation5 + $0x128] sm:$0xff]
    %v100 = vld [vmem:[#allocation5 + $0x130] sm:$0xff]
    %v101 = vld [vmem:[#allocation5 + $0x138] sm:$0xff]
    %v102 = vld [vmem:[#allocation5 + $0x140] sm:$0xff]
    %v103 = vld [vmem:[#allocation5 + $0x148] sm:$0xff]
    %v104 = vld [vmem:[#allocation5 + $0x150] sm:$0xff]
    %v105 = vld [vmem:[#allocation5 + $0x158] sm:$0xff]
    %v106 = vld [vmem:[#allocation5 + $0x160] sm:$0xff]
    %v107 = vld [vmem:[#allocation5 + $0x168] sm:$0xff]
    %v108 = vld [vmem:[#allocation5 + $0x170] sm:$0xff]
    %v109 = vld [vmem:[#allocation5 + $0x178] sm:$0xff]
    %v110 = vld [vmem:[#allocation5 + $0x180] sm:$0xff]
    %v111 = vld [vmem:[#allocation5 + $0x188] sm:$0xff]
    %v112 = vld [vmem:[#allocation5 + $0x190] sm:$0xff]
    %v113 = vld [vmem:[#allocation5 + $0x198] sm:$0xff]
    %v114 = vld [vmem:[#allocation5 + $0x1a0] sm:$0xff]
    %v115 = vld [vmem:[#allocation5 + $0x1a8] sm:$0xff]
    %v116 = vld [vmem:[#allocation5 + $0x1b0] sm:$0xff]
    %v117 = vld [vmem:[#allocation5 + $0x1b8] sm:$0xff]
    %v118 = vld [vmem:[#allocation5 + $0x1c0] sm:$0xff]
    %v119 = vld [vmem:[#allocation5 + $0x1c8] sm:$0xff]
    %v120 = vld [vmem:[#allocation5 + $0x1d0] sm:$0xff]
    %v121 = vld [vmem:[#allocation5 + $0x1d8] sm:$0xff]
    %v122 = vld [vmem:[#allocation5 + $0x1e0] sm:$0xff]
    %v123 = vld [vmem:[#allocation5 + $0x1e8] sm:$0xff]
    %v124 = vld [vmem:[#allocation5 + $0x1f0] sm:$0xff]
    %v125 = vld [vmem:[#allocation5 + $0x1f8] sm:$0xff]
    %v126 = vld [vmem:[#allocation7] sm:$0xf]
    %v128 = vlaneseq
    %v129 = vshrl.u32 %v128, 7
    %v130 = vsub.s32 0, %v129
    %v131 = vrot.slane %v126, %v130
    %v132 = vlaneseq
    %v133 = vshrl.u32 %v132, 7
    %v134 = vsub.s32 1, %v133
    %v135 = vrot.slane %v126, %v134
    %v136 = vlaneseq
    %v137 = vshrl.u32 %v136, 7
    %v138 = vsub.s32 2, %v137
    %v139 = vrot.slane %v126, %v138
    %v140 = vlaneseq
    %v141 = vshrl.u32 %v140, 7
    %v142 = vsub.s32 3, %v141
    %v143 = vrot.slane %v126, %v142
    %148 = vmatprep.subr.mxu0 %v63
    %149 = vmatpush1.msra.mxu0 %v62
    %150 = vmatprep.subr.mxu0 %v67
    %151 = vmatpush1.msra.mxu0 %v66
    %152 = vmatprep.subr.mxu0 %v71
    %153 = vmatpush1.msra.mxu0 %v70
    %154 = vmatprep.subr.mxu0 %v75
    %155 = vmatpush1.msra.mxu0 %v74
    %156 = vmatprep.subr.mxu0 %v79
    %157 = vmatpush1.msra.mxu0 %v78
    %158 = vmatprep.subr.mxu0 %v83
    %159 = vmatpush1.msra.mxu0 %v82
    %160 = vmatprep.subr.mxu0 %v87
    %161 = vmatpush1.msra.mxu0 %v86
    %162 = vmatprep.subr.mxu0 %v91
    %163 = vmatpush1.msra.mxu0 %v90
    %164 = vmatprep.subr.mxu0 %v95
    %165 = vmatpush1.msra.mxu0 %v94
    %166 = vmatprep.subr.mxu0 %v99
    %167 = vmatpush1.msra.mxu0 %v98
    %168 = vmatprep.subr.mxu0 %v103
    %169 = vmatpush1.msra.mxu0 %v102
    %170 = vmatprep.subr.mxu0 %v107
    %171 = vmatpush1.msra.mxu0 %v106
    %172 = vmatprep.subr.mxu0 %v111
    %173 = vmatpush1.msra.mxu0 %v110
    %174 = vmatprep.subr.mxu0 %v115
    %175 = vmatpush1.msra.mxu0 %v114
    %176 = vmatprep.subr.mxu0 %v119
    %177 = vmatpush1.msra.mxu0 %v118
    %178 = vmatprep.subr.mxu0 %v123
    %179 = vmatpush1.msra.mxu0 %v122
    %180 = vmatprep.subr.mxu0 0.0
    %181 = vmatpush1.msra.mxu0 0.0
    %182 = vmatprep.subr.mxu0 0.0
    %183 = vmatpush1.msra.mxu0 0.0
    %184 = vmatprep.subr.mxu0 0.0
    %185 = vmatpush1.msra.mxu0 0.0
    %186 = vmatprep.subr.mxu0 0.0
    %187 = vmatpush1.msra.mxu0 0.0
    %188 = vmatprep.subr.mxu0 0.0
    %189 = vmatpush1.msra.mxu0 0.0
    %190 = vmatprep.subr.mxu0 0.0
    %191 = vmatpush1.msra.mxu0 0.0
    %192 = vmatprep.subr.mxu0 0.0
    %193 = vmatpush1.msra.mxu0 0.0
    %194 = vmatprep.subr.mxu0 0.0
    %195 = vmatpush1.msra.mxu0 0.0
    %196 = vmatprep.subr.mxu0 0.0
    %197 = vmatpush1.msra.mxu0 0.0
    %198 = vmatprep.subr.mxu0 0.0
    %199 = vmatpush1.msra.mxu0 0.0
    %200 = vmatprep.subr.mxu0 0.0
    %201 = vmatpush1.msra.mxu0 0.0
    %202 = vmatprep.subr.mxu0 0.0
    %203 = vmatpush1.msra.mxu0 0.0
    %204 = vmatprep.subr.mxu0 0.0
    %205 = vmatpush1.msra.mxu0 0.0
    %206 = vmatprep.subr.mxu0 0.0
    %207 = vmatpush1.msra.mxu0 0.0
    %208 = vmatprep.subr.mxu0 0.0
    %209 = vmatpush1.msra.mxu0 0.0
    %210 = vmatprep.subr.mxu0 0.0
    %211 = vmatpush1.msra.mxu0 0.0
    %212 = vmatprep.mubr.f32.mxu0 0.0
    %213 = vmatmul.mubr.f32.gmra.mrb[0].mxu0 %v54
    %v214 = vpop.f32.mrb[0].mxu0
    %v215 = vadd.f32 %v131, %v214
    %v216 = vpop.f32.mrb[0].mxu0
    %v217 = vadd.f32 %v135, %v216
    %218 = vmatprep.mubr.f32.mxu0 0.0
    %219 = vmatmul.mubr.f32.gmra.mrb[0].mxu0 %v55
    %v220 = vpop.f32.mrb[0].mxu0
    %v221 = vadd.f32 %v131, %v220
    %v222 = vpop.f32.mrb[0].mxu0
    %v223 = vadd.f32 %v135, %v222
    %224 = vmatprep.mubr.f32.mxu0 0.0
    %225 = vmatmul.mubr.f32.gmra.mrb[0].mxu0 %v56
    %v226 = vpop.f32.mrb[0].mxu0
    %v227 = vadd.f32 %v131, %v226
    %v228 = vpop.f32.mrb[0].mxu0
    %v229 = vadd.f32 %v135, %v228
    %230 = vmatprep.mubr.f32.mxu0 0.0
    %231 = vmatmul.mubr.f32.gmra.mrb[0].mxu0 %v57
    %v232 = vpop.f32.mrb[0].mxu0
    %v233 = vadd.f32 %v131, %v232
    %v234 = vpop.f32.mrb[0].mxu0
    %v235 = vadd.f32 %v135, %v234
    %236 = vmatprep.mubr.f32.mxu0 0.0
    %237 = vmatmul.mubr.f32.gmra.mrb[0].mxu0 %v58
    %v238 = vpop.f32.mrb[0].mxu0
    %v239 = vadd.f32 %v131, %v238
    %v240 = vpop.f32.mrb[0].mxu0
    %v241 = vadd.f32 %v135, %v240
    %242 = vmatprep.mubr.f32.mxu0 0.0
    %243 = vmatmul.mubr.f32.gmra.mrb[0].mxu0 %v59
    %v244 = vpop.f32.mrb[0].mxu0
    %v245 = vadd.f32 %v131, %v244
    %v246 = vpop.f32.mrb[0].mxu0
    %v247 = vadd.f32 %v135, %v246
    %248 = vmatprep.mubr.f32.mxu0 0.0
    %249 = vmatmul.mubr.f32.gmra.mrb[0].mxu0 %v60
    %v250 = vpop.f32.mrb[0].mxu0
    %v251 = vadd.f32 %v131, %v250
    %v252 = vpop.f32.mrb[0].mxu0
    %v253 = vadd.f32 %v135, %v252
    %254 = vmatprep.mubr.f32.mxu0 0.0
    %255 = vmatmul.mubr.f32.gmra.mrb[0].mxu0 %v61
    %v256 = vpop.f32.mrb[0].mxu0
    %v257 = vadd.f32 %v131, %v256
    %v258 = vpop.f32.mrb[0].mxu0
    %v259 = vadd.f32 %v135, %v258
    %260 = vdwg.mxu0
    %261 = vmatprep.subr.mxu0 %v65
    %262 = vmatpush1.msra.mxu0 %v64
    %263 = vmatprep.subr.mxu0 %v69
    %264 = vmatpush1.msra.mxu0 %v68
    %265 = vmatprep.subr.mxu0 %v73
    %266 = vmatpush1.msra.mxu0 %v72
    %267 = vmatprep.subr.mxu0 %v77
    %268 = vmatpush1.msra.mxu0 %v76
    %269 = vmatprep.subr.mxu0 %v81
    %270 = vmatpush1.msra.mxu0 %v80
    %271 = vmatprep.subr.mxu0 %v85
    %272 = vmatpush1.msra.mxu0 %v84
    %273 = vmatprep.subr.mxu0 %v89
    %274 = vmatpush1.msra.mxu0 %v88
    %275 = vmatprep.subr.mxu0 %v93
    %276 = vmatpush1.msra.mxu0 %v92
    %277 = vmatprep.subr.mxu0 %v97
    %278 = vmatpush1.msra.mxu0 %v96
    %279 = vmatprep.subr.mxu0 %v101
    %280 = vmatpush1.msra.mxu0 %v100
    %281 = vmatprep.subr.mxu0 %v105
    %282 = vmatpush1.msra.mxu0 %v104
    %283 = vmatprep.subr.mxu0 %v109
    %284 = vmatpush1.msra.mxu0 %v108
    %285 = vmatprep.subr.mxu0 %v113
    %286 = vmatpush1.msra.mxu0 %v112
    %287 = vmatprep.subr.mxu0 %v117
    %288 = vmatpush1.msra.mxu0 %v116
    %289 = vmatprep.subr.mxu0 %v121
    %290 = vmatpush1.msra.mxu0 %v120
    %291 = vmatprep.subr.mxu0 %v125
    %292 = vmatpush1.msra.mxu0 %v124
    %293 = vmatprep.subr.mxu0 0.0
    %294 = vmatpush1.msra.mxu0 0.0
    %295 = vmatprep.subr.mxu0 0.0
    %296 = vmatpush1.msra.mxu0 0.0
    %297 = vmatprep.subr.mxu0 0.0
    %298 = vmatpush1.msra.mxu0 0.0
    %299 = vmatprep.subr.mxu0 0.0
    %300 = vmatpush1.msra.mxu0 0.0
    %301 = vmatprep.subr.mxu0 0.0
    %302 = vmatpush1.msra.mxu0 0.0
    %303 = vmatprep.subr.mxu0 0.0
    %304 = vmatpush1.msra.mxu0 0.0
    %305 = vmatprep.subr.mxu0 0.0
    %306 = vmatpush1.msra.mxu0 0.0
    %307 = vmatprep.subr.mxu0 0.0
    %308 = vmatpush1.msra.mxu0 0.0
    %309 = vmatprep.subr.mxu0 0.0
    %310 = vmatpush1.msra.mxu0 0.0
    %311 = vmatprep.subr.mxu0 0.0
    %312 = vmatpush1.msra.mxu0 0.0
    %313 = vmatprep.subr.mxu0 0.0
    %314 = vmatpush1.msra.mxu0 0.0
    %315 = vmatprep.subr.mxu0 0.0
    %316 = vmatpush1.msra.mxu0 0.0
    %317 = vmatprep.subr.mxu0 0.0
    %318 = vmatpush1.msra.mxu0 0.0
    %319 = vmatprep.subr.mxu0 0.0
    %320 = vmatpush1.msra.mxu0 0.0
    %321 = vmatprep.subr.mxu0 0.0
    %322 = vmatpush1.msra.mxu0 0.0
    %323 = vmatprep.subr.mxu0 0.0
    %324 = vmatpush1.msra.mxu0 0.0
    %325 = vmatprep.mubr.f32.mxu0 0.0
    %326 = vmatmul.mubr.f32.gmra.mrb[0].mxu0 %v54
    %v327 = vpop.f32.mrb[0].mxu0
    %v328 = vadd.f32 %v139, %v327
    %v329 = vpop.f32.mrb[0].mxu0
    %v330 = vadd.f32 %v143, %v329
    %331 = vmatprep.mubr.f32.mxu0 0.0
    %332 = vmatmul.mubr.f32.gmra.mrb[0].mxu0 %v55
    %v333 = vpop.f32.mrb[0].mxu0
    %v334 = vadd.f32 %v139, %v333
    %v335 = vpop.f32.mrb[0].mxu0
    %v336 = vadd.f32 %v143, %v335
    %337 = vmatprep.mubr.f32.mxu0 0.0
    %338 = vmatmul.mubr.f32.gmra.mrb[0].mxu0 %v56
    %v339 = vpop.f32.mrb[0].mxu0
    %v340 = vadd.f32 %v139, %v339
    %v341 = vpop.f32.mrb[0].mxu0
    %v342 = vadd.f32 %v143, %v341
    %343 = vmatprep.mubr.f32.mxu0 0.0
    %344 = vmatmul.mubr.f32.gmra.mrb[0].mxu0 %v57
    %v345 = vpop.f32.mrb[0].mxu0
    %v346 = vadd.f32 %v139, %v345
    %v347 = vpop.f32.mrb[0].mxu0
    %v348 = vadd.f32 %v143, %v347
    %349 = vmatprep.mubr.f32.mxu0 0.0
    %350 = vmatmul.mubr.f32.gmra.mrb[0].mxu0 %v58
    %v351 = vpop.f32.mrb[0].mxu0
    %v352 = vadd.f32 %v139, %v351
    %v353 = vpop.f32.mrb[0].mxu0
    %v354 = vadd.f32 %v143, %v353
    %355 = vmatprep.mubr.f32.mxu0 0.0
    %356 = vmatmul.mubr.f32.gmra.mrb[0].mxu0 %v59
    %v357 = vpop.f32.mrb[0].mxu0
    %v358 = vadd.f32 %v139, %v357
    %v359 = vpop.f32.mrb[0].mxu0
    %v360 = vadd.f32 %v143, %v359
    %361 = vmatprep.mubr.f32.mxu0 0.0
    %362 = vmatmul.mubr.f32.gmra.mrb[0].mxu0 %v60
    %v363 = vpop.f32.mrb[0].mxu0
    %v364 = vadd.f32 %v139, %v363
    %v365 = vpop.f32.mrb[0].mxu0
    %v366 = vadd.f32 %v143, %v365
    %367 = vmatprep.mubr.f32.mxu0 0.0
    %368 = vmatmul.mubr.f32.gmra.mrb[0].mxu0 %v61
    %v369 = vpop.f32.mrb[0].mxu0
    %v370 = vadd.f32 %v139, %v369
    %v371 = vpop.f32.mrb[0].mxu0
    %v372 = vadd.f32 %v143, %v371
    %373 = vdwg.mxu0
    %374 = vst [vmem:[#allocation8] sm:$0xff] %v215
    %375 = vst [vmem:[#allocation8 + $0x8] sm:$0xff] %v217
    %376 = vst [vmem:[#allocation8 + $0x10] sm:$0xff] %v328
    %377 = vst [vmem:[#allocation8 + $0x18] sm:$0xff] %v330
    %378 = vst [vmem:[#allocation8 + $0x20] sm:$0xff] %v221
    %379 = vst [vmem:[#allocation8 + $0x28] sm:$0xff] %v223
    %380 = vst [vmem:[#allocation8 + $0x30] sm:$0xff] %v334
    %381 = vst [vmem:[#allocation8 + $0x38] sm:$0xff] %v336
    %382 = vst [vmem:[#allocation8 + $0x40] sm:$0xff] %v227
    %383 = vst [vmem:[#allocation8 + $0x48] sm:$0xff] %v229
    %384 = vst [vmem:[#allocation8 + $0x50] sm:$0xff] %v340
    %385 = vst [vmem:[#allocation8 + $0x58] sm:$0xff] %v342
    %386 = vst [vmem:[#allocation8 + $0x60] sm:$0xff] %v233
    %387 = vst [vmem:[#allocation8 + $0x68] sm:$0xff] %v235
    %388 = vst [vmem:[#allocation8 + $0x70] sm:$0xff] %v346
    %389 = vst [vmem:[#allocation8 + $0x78] sm:$0xff] %v348
    %390 = vst [vmem:[#allocation8 + $0x80] sm:$0xff] %v239
    %391 = vst [vmem:[#allocation8 + $0x88] sm:$0xff] %v241
    %392 = vst [vmem:[#allocation8 + $0x90] sm:$0xff] %v352
    %393 = vst [vmem:[#allocation8 + $0x98] sm:$0xff] %v354
    %394 = vst [vmem:[#allocation8 + $0xa0] sm:$0xff] %v245
    %395 = vst [vmem:[#allocation8 + $0xa8] sm:$0xff] %v247
    %396 = vst [vmem:[#allocation8 + $0xb0] sm:$0xff] %v358
    %397 = vst [vmem:[#allocation8 + $0xb8] sm:$0xff] %v360
    %398 = vst [vmem:[#allocation8 + $0xc0] sm:$0xff] %v251
    %399 = vst [vmem:[#allocation8 + $0xc8] sm:$0xff] %v253
    %400 = vst [vmem:[#allocation8 + $0xd0] sm:$0xff] %v364
    %401 = vst [vmem:[#allocation8 + $0xd8] sm:$0xff] %v366
    %402 = vst [vmem:[#allocation8 + $0xe0] sm:$0xff] %v257
    %403 = vst [vmem:[#allocation8 + $0xe8] sm:$0xff] %v259
    %404 = vst [vmem:[#allocation8 + $0xf0] sm:$0xff] %v370
    %405 = vst [vmem:[#allocation8 + $0xf8] sm:$0xff] %v372
    // Predicated region
    $region26: #{tpu_custom_call.1} parent=1 // pred_check
      _
    $region27: #{tpu_custom_call.1} parent=1 // pred_check_branch
      %407 = sbr.rel (0) target = $region29
    $region28: #{tpu_custom_call.1} parent=1 // pred_region
      %s409 = ssub.s32 4096, 4096
      %410 = vsyncadd [#allocation4], %s409
      %s411 = sshll.u32 [#allocation8], 4
      %s412 = int_to_ptr.vmem [resolvable:$true] %s411
      %417 = dma.vmem_to_hbm [thread:$0]  %s412, 4096, %s3, [#allocation4], 512, 512, 32
    $region29: #{tpu_custom_call.1} parent=1 // pred_fallthru
      _
    // Predicated region
    $region30: #{tpu_custom_call.1} parent=1 // pred_check
      _
    $region31: #{tpu_custom_call.1} parent=1 // pred_check_branch
      %419 = sbr.rel (0) target = $region33
    $region32: #{tpu_custom_call.1} parent=1 // pred_region
      %420 = dma.done [#allocation4], 4096
    $region33: #{tpu_custom_call.1} parent=1 // pred_fallthru
      _
    %421 = vsyncpa [#allocation3], 1
    %422 = vsyncpa [#allocation6], 1
    %423 = vsyncpa [#allocation4], 1

</llo_original>
